<compile_context>
chip_gen: v6e
topology: v6e:2x2x1
jax: 0.10.0
libtpu: 0.0.40
codegen_flags: <defaults>
</compile_context>

<pallas_src>
import functools
import math

import jax
import jax.numpy as jnp
from jax.experimental import pallas as pl
from jax.experimental.pallas import tpu as pltpu


def _round_up(x, m):
    return ((x + m - 1) // m) * m


# ---------------------------------------------------------------------------
# Kernels
# ---------------------------------------------------------------------------
def _resident_kernel(x_ref, w_ref, b_ref, o_ref):
    """Whole (K, N) weight resident in VMEM: one row tile per grid step."""
    o_ref[...] = (
        jnp.dot(x_ref[...], w_ref[...], preferred_element_type=jnp.float32)
        + b_ref[...]
    ).astype(o_ref.dtype)


def _ktiled_kernel(x_ref, w_ref, b_ref, o_ref):
    """General (M, N, K) tiled matmul; accumulate directly into the resident
    f32 output block (no scratch accumulator)."""
    k = pl.program_id(2)

    @pl.when(k == 0)
    def _():
        o_ref[...] = jnp.zeros_like(o_ref)

    o_ref[...] += jnp.dot(
        x_ref[...], w_ref[...], preferred_element_type=jnp.float32
    )

    @pl.when(k == pl.num_programs(2) - 1)
    def _():
        o_ref[...] += b_ref[...]


# ---------------------------------------------------------------------------
# pallas_call wrappers (padded shapes, static tile sizes)
# ---------------------------------------------------------------------------
def _vmem_limit(working_set_bytes):
    # Leave headroom above the working set, stay under the v7x 64 MiB budget.
    return min(max(int(working_set_bytes * 1.5), 32 * 1024 * 1024),
               48 * 1024 * 1024)


@functools.partial(jax.jit, static_argnames=("tm",))
def _resident_call(x2d, w, b2d, *, tm):
    Mp, K = x2d.shape
    Np = w.shape[1]
    dsize = jnp.dtype(x2d.dtype).itemsize
    # double-buffered x/o tiles + (at most double-buffered) resident weight
    est = 2 * (tm * K + K * Np) * dsize + 2 * (tm * Np + Np) * 4

    return pl.pallas_call(
        _resident_kernel,
        out_shape=jax.ShapeDtypeStruct((Mp, Np), jnp.float32),
        grid_spec=pltpu.PrefetchScalarGridSpec(
            num_scalar_prefetch=0,
            grid=(Mp // tm,),
            in_specs=[
                pl.BlockSpec((tm, K), lambda i: (i, 0)),
                pl.BlockSpec((K, Np), lambda i: (0, 0)),   # constant: DMA'd once
                pl.BlockSpec((1, Np), lambda i: (0, 0)),
            ],
            out_specs=pl.BlockSpec((tm, Np), lambda i: (i, 0)),
        ),
        compiler_params=pltpu.CompilerParams(
            dimension_semantics=("parallel",),
            vmem_limit_bytes=_vmem_limit(est),
        ),
        cost_estimate=pl.CostEstimate(
            flops=2 * Mp * K * Np,
            transcendentals=0,
            bytes_accessed=dsize * (Mp * K + K * Np) + 4 * (Np + Mp * Np),
        ),
    )(x2d, w, b2d)


@functools.partial(jax.jit, static_argnames=("tm", "tn", "tk"))
def _ktiled_call(x2d, w, b2d, *, tm, tn, tk):
    Mp, Kp = x2d.shape
    Np = w.shape[1]
    dsize = jnp.dtype(x2d.dtype).itemsize
    est = 2 * (tm * tk + tk * tn) * dsize + 2 * (tm * tn + tn) * 4
    grid = (Mp // tm, Np // tn, Kp // tk)

    return pl.pallas_call(
        _ktiled_kernel,
        out_shape=jax.ShapeDtypeStruct((Mp, Np), jnp.float32),
        grid_spec=pltpu.PrefetchScalarGridSpec(
            num_scalar_prefetch=0,
            grid=grid,
            in_specs=[
                pl.BlockSpec((tm, tk), lambda i, j, k: (i, k)),
                pl.BlockSpec((tk, tn), lambda i, j, k: (k, j)),
                pl.BlockSpec((1, tn), lambda i, j, k: (0, j)),
            ],
            out_specs=pl.BlockSpec((tm, tn), lambda i, j, k: (i, j)),
        ),
        compiler_params=pltpu.CompilerParams(
            dimension_semantics=("parallel", "parallel", "arbitrary"),
            vmem_limit_bytes=_vmem_limit(est),
        ),
        cost_estimate=pl.CostEstimate(
            flops=2 * Mp * Kp * Np,
            transcendentals=0,
            bytes_accessed=dsize * (Mp * Kp * (Np // tn) + Kp * Np * (Mp // tm))
            + 4 * (Np + Mp * Np),
        ),
    )(x2d, w, b2d)


# ---------------------------------------------------------------------------
# Tile selection + padding wrapper
# ---------------------------------------------------------------------------
def _pick_row_tile(M):
    """Row tile minimising padding waste; prefer >= 2 blocks (v7x megacore),
    then the larger tile."""
    if M <= 128:
        return _round_up(max(M, 8), 8)   # single block == full padded dim
    best_key, best_tm = None, None
    for tm in (512, 256, 128):
        Mp = _round_up(M, tm)
        nblk = Mp // tm
        key = (Mp - M, 0 if nblk >= 2 else 1, -tm)
        if best_key is None or key < best_key:
            best_key, best_tm = key, tm
    return best_tm


def linear_pallas(x2d, weight_t, bias1d, *, use_bf16=False):
    """x2d: (M, ch), weight_t: (ch, out), bias1d: (out,) -> (M, out) f32."""
    M, ch = x2d.shape
    out = weight_t.shape[1]

    in_dtype = jnp.bfloat16 if use_bf16 else jnp.float32
    x2d = x2d.astype(in_dtype)
    weight_t = weight_t.astype(in_dtype)
    bias1d = bias1d.astype(jnp.float32)

    tm = _pick_row_tile(M)
    Mp = _round_up(M, tm)

    # ---- Path A: small head -> keep the whole weight resident, no K axis ----
    Np_a = _round_up(out, 128)
    if Np_a <= 512 and ch <= 2048:
        Np = Np_a
        x_p = x2d if Mp == M else jnp.pad(x2d, ((0, Mp - M), (0, 0)))
        w_p = weight_t if Np == out else jnp.pad(weight_t, ((0, 0), (0, Np - out)))
        b_p = bias1d if Np == out else jnp.pad(bias1d, ((0, Np - out),))
        y_p = _resident_call(x_p, w_p, b_p.reshape(1, Np), tm=tm)
        return y_p[:M, :out]

    # ---- Path B: general tiled matmul over (rows, out-tiles, K-tiles) -------
    if out <= 128:
        Np, tn = 128, 128
    else:
        Np = _round_up(out, 256)
        tn = 512 if Np % 512 == 0 else 256

    if ch <= 2048:
        tk, Kp = ch, ch               # one K block (full dim is always legal)
    else:
        best_key, tk, Kp = None, None, None
        for cand in (2048, 1024, 512):
            Kp_c = _round_up(ch, cand)
            key = (Kp_c - ch, -cand)
            if best_key is None or key < best_key:
                best_key, tk, Kp = key, cand, Kp_c

    x_p = x2d
    if (Mp, Kp) != (M, ch):
        x_p = jnp.pad(x2d, ((0, Mp - M), (0, Kp - ch)))
    w_p = weight_t
    if (Kp, Np) != (ch, out):
        w_p = jnp.pad(weight_t, ((0, Kp - ch), (0, Np - out)))
    b_p = bias1d if Np == out else jnp.pad(bias1d, ((0, Np - out),))

    y_p = _ktiled_call(x_p, w_p, b_p.reshape(1, Np), tm=tm, tn=tn, tk=tk)
    return y_p[:M, :out]


class MLPOutPallas:
    """JAX/Pallas equivalent of the PyTorch MLP_out module."""

    def __init__(self, input_dim, output_dim, key, use_bf16=False):
        self.input_dim = input_dim
        self.output_dim = output_dim
        self.use_bf16 = use_bf16
        kw, kb = jax.random.split(key)
        # Mimic nn.Linear's uniform(-1/sqrt(in), 1/sqrt(in)) init.
        bound = 1.0 / math.sqrt(float(input_dim))
        w = jax.random.uniform(
            kw, (output_dim, input_dim), jnp.float32, -bound, bound
        )
        b = jax.random.uniform(kb, (output_dim,), jnp.float32, -bound, bound)
        # torch stores weight as (out, in); keep (in, out) since the kernel
        # computes x @ W^T directly.
        self.weight_t = jnp.transpose(w)  # (in, out)
        self.bias = b                     # (out,)

    def __call__(self, x):
        # x: (t, b, n, ch) -> (t, b, n, output_dim), float32
        t, b, n, ch = x.shape
        assert ch == self.input_dim
        x2d = x.reshape(t * b * n, ch).astype(jnp.float32)
        y2d = linear_pallas(x2d, self.weight_t, self.bias,
                            use_bf16=self.use_bf16)
        return y2d.reshape(t, b, n, self.output_dim)


if __name__ == "__main__":
    key = jax.random.PRNGKey(0)

    def _ref(x, model):
        return (jnp.einsum("tbnc,co->tbno", x, model.weight_t)
                + model.bias.reshape(1, 1, 1, -1))

    # 1) Small shape, resident-weight path, single row tile.
    k_x, k_p, key = jax.random.split(key, 3)
    t, b, n, ch, out_dim = 4, 2, 8, 32, 16
    x = jax.random.normal(k_x, (t, b, n, ch), dtype=jnp.float32)
    model = MLPOutPallas(input_dim=ch, output_dim=out_dim, key=k_p)
    y = jax.block_until_ready(model(x))
    assert y.shape == (t, b, n, out_dim)
    assert jnp.allclose(y, _ref(x, model), atol=1e-4, rtol=1e-4)

    # 2) Resident-weight path, multiple row tiles (exercises padding on M).
    k_x, k_p, key = jax.random.split(key, 3)
    t, b, n, ch, out_dim = 2, 3, 50, 96, 40
    x = jax.random.normal(k_x, (t, b, n, ch), dtype=jnp.float32)
    model = MLPOutPallas(input_dim=ch, output_dim=out_dim, key=k_p)
    y = jax.block_until_ready(model(x))
    assert y.shape == (t, b, n, out_dim)
    assert jnp.allclose(y, _ref(x, model), atol=1e-4, rtol=1e-4)

    # 3) Wide head -> general (rows, N, K) tiled path with direct o_ref accumulation.
    k_x, k_p, key = jax.random.split(key, 3)
    t, b, n, ch, out_dim = 2, 2, 80, 384, 640
    x = jax.random.normal(k_x, (t, b, n, ch), dtype=jnp.float32)
    model = MLPOutPallas(input_dim=ch, output_dim=out_dim, key=k_p)
    y = jax.block_until_ready(model(x))
    assert y.shape == (t, b, n, out_dim)
    assert jnp.allclose(y, _ref(x, model), atol=2e-4, rtol=2e-4)

    print("KERNEL_OK")
</pallas_src>

<mosaic_0001>
module attributes {stable_mosaic.version = 11 : i64} {
  func.func @_resident_kernel(%arg0: i32, %arg1: memref<64x32xf32, #tpu.memory_space<vmem>>, %arg2: memref<32x128xf32, #tpu.memory_space<vmem>>, %arg3: memref<1x128xf32, #tpu.memory_space<vmem>>, %arg4: memref<64x128xf32, #tpu.memory_space<vmem>>) attributes {dimension_semantics = [#tpu.dimension_semantics<parallel>], iteration_bounds = array<i64: 1>, scalar_prefetch = 0 : i64, scratch_operands = 0 : i64, tpu.core_type = #tpu.core_type<tc>, window_params = [{transform_indices = @transform_0, window_bounds = array<i64: 64, 32>}, {pipeline_mode = #tpu.pipeline_mode<synchronous>, transform_indices = @transform_1, window_bounds = array<i64: 32, 128>}, {pipeline_mode = #tpu.pipeline_mode<synchronous>, transform_indices = @transform_2, window_bounds = array<i64: 1, 128>}, {transform_indices = @transform_3, window_bounds = array<i64: 64, 128>}]} {
    %c0 = arith.constant 0 : index
    %c0_0 = arith.constant 0 : index
    %0 = vector.load %arg1[%c0, %c0_0] : memref<64x32xf32, #tpu.memory_space<vmem>>, vector<64x32xf32>
    %c0_1 = arith.constant 0 : index
    %c0_2 = arith.constant 0 : index
    %1 = vector.load %arg2[%c0_1, %c0_2] : memref<32x128xf32, #tpu.memory_space<vmem>>, vector<32x128xf32>
    %cst = arith.constant dense<0.000000e+00> : vector<64x128xf32>
    %2 = tpu.matmul %0, %1, %cst {dimension_numbers = #tpu.dot_dimension_numbers<[1], [0], [0], [1], [0, 0, 1, 1], [], []>} : vector<64x32xf32>, vector<32x128xf32>, vector<64x128xf32> -> vector<64x128xf32>
    %c0_3 = arith.constant 0 : index
    %c0_4 = arith.constant 0 : index
    %3 = vector.load %arg3[%c0_3, %c0_4] : memref<1x128xf32, #tpu.memory_space<vmem>>, vector<1x128xf32>
    %4 = vector.broadcast %3 : vector<1x128xf32> to vector<64x128xf32>
    %5 = arith.addf %2, %4 : vector<64x128xf32>
    %c0_5 = arith.constant 0 : index
    %c0_6 = arith.constant 0 : index
    %6 = vector.load %arg4[%c0_5, %c0_6] : memref<64x128xf32, #tpu.memory_space<vmem>>, vector<64x128xf32>
    tpu.vector_store %arg4[%c0_5, %c0_6], %5 {strides = array<i32>} : memref<64x128xf32, #tpu.memory_space<vmem>>, vector<64x128xf32>,
    return
  }
  func.func @transform_0(%arg0: i32) -> (i32, i32) {
    %c0_i32 = arith.constant 0 : i32
    %c0_i32_0 = arith.constant 0 : i32
    return %arg0, %c0_i32 : i32, i32
  }
  func.func @transform_1(%arg0: i32) -> (i32, i32) {
    %c0_i32 = arith.constant 0 : i32
    %c0_i32_0 = arith.constant 0 : i32
    %c0_i32_1 = arith.constant 0 : i32
    return %c0_i32, %c0_i32_0 : i32, i32
  }
  func.func @transform_2(%arg0: i32) -> (i32, i32) {
    %c0_i32 = arith.constant 0 : i32
    %c0_i32_0 = arith.constant 0 : i32
    %c0_i32_1 = arith.constant 0 : i32
    return %c0_i32, %c0_i32_0 : i32, i32
  }
  func.func @transform_3(%arg0: i32) -> (i32, i32) {
    %c0_i32 = arith.constant 0 : i32
    %c0_i32_0 = arith.constant 0 : i32
    return %arg0, %c0_i32 : i32, i32
  }
}

</mosaic_0001>

<llo_original>
// kernel: _resident_call.1
$region0: #{_resident_call.1}
  #allocation0 [shape = 'u32[]', space=smem, size = 0x4, offset = 0x4, fixed_abs, tag = 'smem constant byte address 0x4 - core index']
  #allocation1 [shape = 'u32[144,128]{1,0:T(1,128)}', space=vmem, size = 0x12000, scoped, tag = 'internal scratch']
  %s0 = inlined_call_operand.vmem [shape: f32[64,32], index: 0, kind: input, shape index: {}]
  %s1 = inlined_call_operand.vmem [shape: f32[32,128], index: 1, kind: input, shape index: {}]
  %s2 = inlined_call_operand.vmem [shape: f32[1,128], index: 2, kind: input, shape index: {}]
  %s3 = inlined_call_operand.hbm [shape: f32[64,128], index: 3, kind: output, shape index: {}]
  %s4 = sld [smem:[#allocation0]]
  $region22: #{_resident_call.1} parent=0
    _
  %s6 = ssub.s32 1, %s4
  %s7 = scalar_select 0, %s6, %s4
  $region1: #{_resident_call.1} parent=0
    #allocation2 [shape = 'u8[32768]{0}', space=vmem, size = 0x8000, scoped, tag = 'output window, operand 0, single buffered']
    #allocation3 [shape = 's32[1]{0}', space=sflag, size = 0x4, scoped, tag = 'scoped memory for _resident_call.1']
    %8 = vsyncpa [#allocation3], 0
    // Predicated region
    $region2: #{_resident_call.1} parent=1 // pred_check
      _
    $region3: #{_resident_call.1} parent=1 // pred_check_branch
      %10 = sbr.rel (0) target = $region5
    $region4: #{_resident_call.1} parent=1 // pred_region
      _
    $region5: #{_resident_call.1} parent=1 // pred_fallthru
      _
    // Predicated region
    $region6: #{_resident_call.1} parent=1 // pred_check
      _
    $region7: #{_resident_call.1} parent=1 // pred_check_branch
      %12 = sbr.rel (0) target = $region9
    $region8: #{_resident_call.1} parent=1 // pred_region
      _
    $region9: #{_resident_call.1} parent=1 // pred_fallthru
      _
    // Predicated region
    $region10: #{_resident_call.1} parent=1 // pred_check
      _
    $region11: #{_resident_call.1} parent=1 // pred_check_branch
      %14 = sbr.rel (0) target = $region13
    $region12: #{_resident_call.1} parent=1 // pred_region
      _
    $region13: #{_resident_call.1} parent=1 // pred_fallthru
      _
    %v15 = vld [vmem:[%s0] sm:$0xff]
    %v16 = vld [vmem:[%s0 + $0x8] sm:$0xff]
    %v17 = vld [vmem:[%s0 + $0x10] sm:$0xff]
    %v18 = vld [vmem:[%s0 + $0x18] sm:$0xff]
    %v19 = vld [vmem:[%s0 + $0x20] sm:$0xff]
    %v20 = vld [vmem:[%s0 + $0x28] sm:$0xff]
    %v21 = vld [vmem:[%s0 + $0x30] sm:$0xff]
    %v22 = vld [vmem:[%s0 + $0x38] sm:$0xff]
    %v23 = vld [vmem:[%s1] sm:$0xff]
    %v24 = vld [vmem:[%s1 + $0x8] sm:$0xff]
    %v25 = vld [vmem:[%s1 + $0x10] sm:$0xff]
    %v26 = vld [vmem:[%s1 + $0x18] sm:$0xff]
    %v27 = vld [vmem:[%s2] sm:$0x1]
    %v29 = vlaneseq
    %v30 = vshrl.u32 %v29, 7
    %v31 = vsub.s32 0, %v30
    %v32 = vrot.slane %v27, %v31
    %vm34 = vcmask 261120
    %v36 = vsel %vm34, %v15, 0
    %v39 = vsel %vm34, %v16, 0
    %v42 = vsel %vm34, %v17, 0
    %v45 = vsel %vm34, %v18, 0
    %v48 = vsel %vm34, %v19, 0
    %v51 = vsel %vm34, %v20, 0
    %v54 = vsel %vm34, %v21, 0
    %v57 = vsel %vm34, %v22, 0
    %59 = vmatprep.subr.mxu0 0.0
    %60 = vmatpush1.msra.mxu0 0.0
    %61 = vmatprep.subr.mxu0 0.0
    %62 = vmatpush1.msra.mxu0 0.0
    %63 = vmatprep.subr.mxu0 0.0
    %64 = vmatpush1.msra.mxu0 0.0
    %65 = vmatprep.subr.mxu0 0.0
    %66 = vmatpush1.msra.mxu0 0.0
    %67 = vmatprep.subr.mxu0 0.0
    %68 = vmatpush1.msra.mxu0 0.0
    %69 = vmatprep.subr.mxu0 0.0
    %70 = vmatpush1.msra.mxu0 0.0
    %71 = vmatprep.subr.mxu0 0.0
    %72 = vmatpush1.msra.mxu0 0.0
    %73 = vmatprep.subr.mxu0 0.0
    %74 = vmatpush1.msra.mxu0 0.0
    %75 = vmatprep.subr.mxu0 0.0
    %76 = vmatpush1.msra.mxu0 0.0
    %77 = vmatprep.subr.mxu0 0.0
    %78 = vmatpush1.msra.mxu0 0.0
    %79 = vmatprep.subr.mxu0 0.0
    %80 = vmatpush1.msra.mxu0 0.0
    %81 = vmatprep.subr.mxu0 0.0
    %82 = vmatpush1.msra.mxu0 0.0
    %83 = vmatprep.subr.mxu0 0.0
    %84 = vmatpush1.msra.mxu0 %v26
    %85 = vmatprep.subr.mxu0 0.0
    %86 = vmatpush1.msra.mxu0 %v25
    %87 = vmatprep.subr.mxu0 0.0
    %88 = vmatpush1.msra.mxu0 %v24
    %89 = vmatprep.subr.mxu0 0.0
    %90 = vmatpush1.msra.mxu0 %v23
    %91 = vmatprep.subr.mxu0 0.0
    %92 = vmatpush2.msra.mxu0 0.0
    %93 = vmatprep.subr.mxu0 0.0
    %94 = vmatpush2.msra.mxu0 0.0
    %95 = vmatprep.subr.mxu0 0.0
    %96 = vmatpush2.msra.mxu0 0.0
    %97 = vmatprep.subr.mxu0 0.0
    %98 = vmatpush2.msra.mxu0 0.0
    %99 = vmatprep.subr.mxu0 0.0
    %100 = vmatpush2.msra.mxu0 0.0
    %101 = vmatprep.subr.mxu0 0.0
    %102 = vmatpush2.msra.mxu0 0.0
    %103 = vmatprep.subr.mxu0 0.0
    %104 = vmatpush2.msra.mxu0 0.0
    %105 = vmatprep.subr.mxu0 0.0
    %106 = vmatpush2.msra.mxu0 0.0
    %107 = vmatprep.subr.mxu0 0.0
    %108 = vmatpush2.msra.mxu0 0.0
    %109 = vmatprep.subr.mxu0 0.0
    %110 = vmatpush2.msra.mxu0 0.0
    %111 = vmatprep.subr.mxu0 0.0
    %112 = vmatpush2.msra.mxu0 0.0
    %113 = vmatprep.subr.mxu0 0.0
    %114 = vmatpush2.msra.mxu0 0.0
    %115 = vmatprep.subr.mxu0 0.0
    %116 = vmatpush2.msra.mxu0 0.0
    %117 = vmatprep.subr.mxu0 0.0
    %118 = vmatpush2.msra.mxu0 0.0
    %119 = vmatprep.subr.mxu0 0.0
    %120 = vmatpush2.msra.mxu0 0.0
    %121 = vmatprep.subr.mxu0 0.0
    %122 = vmatpush2.msra.mxu0 0.0
    %123 = vmatprep.mubr.f32.mxu0 0.0
    %124 = vmatmul.mubr.f32.gmra.mxu0 %v36
    %v125 = vpop.f32.mrf.mxu0
    %v126 = vadd.f32 %v32, %v125
    %v127 = vpop.f32.mrf.mxu0
    %128 = vmatprep.mubr.f32.mxu0 0.0
    %129 = vmatmul.mubr.f32.gmra.mxu0 %v39
    %v130 = vpop.f32.mrf.mxu0
    %v131 = vadd.f32 %v32, %v130
    %v132 = vpop.f32.mrf.mxu0
    %133 = vmatprep.mubr.f32.mxu0 0.0
    %134 = vmatmul.mubr.f32.gmra.mxu0 %v42
    %v135 = vpop.f32.mrf.mxu0
    %v136 = vadd.f32 %v32, %v135
    %v137 = vpop.f32.mrf.mxu0
    %138 = vmatprep.mubr.f32.mxu0 0.0
    %139 = vmatmul.mubr.f32.gmra.mxu0 %v45
    %v140 = vpop.f32.mrf.mxu0
    %v141 = vadd.f32 %v32, %v140
    %v142 = vpop.f32.mrf.mxu0
    %143 = vmatprep.mubr.f32.mxu0 0.0
    %144 = vmatmul.mubr.f32.gmra.mxu0 %v48
    %v145 = vpop.f32.mrf.mxu0
    %v146 = vadd.f32 %v32, %v145
    %v147 = vpop.f32.mrf.mxu0
    %148 = vmatprep.mubr.f32.mxu0 0.0
    %149 = vmatmul.mubr.f32.gmra.mxu0 %v51
    %v150 = vpop.f32.mrf.mxu0
    %v151 = vadd.f32 %v32, %v150
    %v152 = vpop.f32.mrf.mxu0
    %153 = vmatprep.mubr.f32.mxu0 0.0
    %154 = vmatmul.mubr.f32.gmra.mxu0 %v54
    %v155 = vpop.f32.mrf.mxu0
    %v156 = vadd.f32 %v32, %v155
    %v157 = vpop.f32.mrf.mxu0
    %158 = vmatprep.mubr.f32.mxu0 0.0
    %159 = vmatmul.mubr.f32.gmra.mxu0 %v57
    %v160 = vpop.f32.mrf.mxu0
    %v161 = vadd.f32 %v32, %v160
    %v162 = vpop.f32.mrf.mxu0
    %163 = vdwg.mxu0
    %164 = vst [vmem:[#allocation2] sm:$0xff] %v126
    %165 = vst [vmem:[#allocation2 + $0x8] sm:$0xff] %v131
    %166 = vst [vmem:[#allocation2 + $0x10] sm:$0xff] %v136
    %167 = vst [vmem:[#allocation2 + $0x18] sm:$0xff] %v141
    %168 = vst [vmem:[#allocation2 + $0x20] sm:$0xff] %v146
    %169 = vst [vmem:[#allocation2 + $0x28] sm:$0xff] %v151
    %170 = vst [vmem:[#allocation2 + $0x30] sm:$0xff] %v156
    %171 = vst [vmem:[#allocation2 + $0x38] sm:$0xff] %v161
    // Predicated region
    $region14: #{_resident_call.1} parent=1 // pred_check
      _
    $region15: #{_resident_call.1} parent=1 // pred_check_branch
      %173 = sbr.rel (0) target = $region17
    $region16: #{_resident_call.1} parent=1 // pred_region
      %s175 = ssub.s32 1024, 1024
      %176 = vsyncadd [#allocation3], %s175
      %s177 = sshll.u32 [#allocation2], 4
      %s178 = int_to_ptr.vmem [resolvable:$true] %s177
      %183 = dma.vmem_to_hbm [thread:$0]  %s178, 1024, %s3, [#allocation3], 128, 128, 8
    $region17: #{_resident_call.1} parent=1 // pred_fallthru
      _
    // Predicated region
    $region18: #{_resident_call.1} parent=1 // pred_check
      _
    $region19: #{_resident_call.1} parent=1 // pred_check_branch
      %185 = sbr.rel (0) target = $region21
    $region20: #{_resident_call.1} parent=1 // pred_region
      %186 = dma.done [#allocation3], 1024
    $region21: #{_resident_call.1} parent=1 // pred_fallthru
      _
    %187 = vsyncpa [#allocation3], 1

</llo_original>
